<compile_context>
chip_gen: v7x
topology: tpu7x:2x2x1
jax: 0.10.0
libtpu: 0.0.40
codegen_flags: <defaults>
</compile_context>

<pallas_src>
import functools

import jax
import jax.numpy as jnp
from jax import lax
from jax.experimental import pallas as pl
from jax.experimental.pallas import tpu as pltpu

EPS = 1e-3  # norm_cfg eps


def _shift_flat(a, s):
    """out[:, p] = a[:, p - s], zero-filled at the flat boundary (static s)."""
    if s == 0:
        return a
    c, l = a.shape
    z = jnp.zeros((c, abs(s)), a.dtype)
    if s > 0:
        return jnp.concatenate([z, a[:, : l - s]], axis=1)
    return jnp.concatenate([a[:, -s:], z], axis=1)


def rb_kernel(x_ref, w_ref, b_ref, o_ref, *, width):
    # x_ref : (1, Cin,  H*W) bf16   (flattened CHW, spatial on lanes)
    # w_ref : (3, 3, Cout, Cin) bf16  equivalent (reparameterized) 3x3 kernel
    # b_ref : (Cout, 1) f32           equivalent bias
    # o_ref : (1, Cout, H*W) f32
    _, cin, hw = x_ref.shape
    W = width

    xf = x_ref[0]                                            # (Cin, HW) bf16

    # Column-validity masks for the horizontal taps (zero-padding semantics).
    col = lax.broadcasted_iota(jnp.int32, (1, hw), 1) % W
    not_first_col = (col >= 1).astype(xf.dtype)              # source x-1 exists
    not_last_col = (col <= W - 2).astype(xf.dtype)           # source x+1 exists

    # Three column-shifted slabs (dx = 0, 1, 2), zero at image left/right edges.
    x_l = _shift_flat(xf, 1) * not_first_col                 # reads (y, x-1)
    x_c = xf                                                 # reads (y, x  )
    x_r = _shift_flat(xf, -1) * not_last_col                 # reads (y, x+1)
    cols = (x_l, x_c, x_r)

    # q_dy[p] = sum_dx w[dy,dx] @ col_dx[p]; the vertical (dy) shift commutes
    # with the per-pixel channel matmul and is applied to q afterwards.  The
    # zero fill of the +-W shift implements the top/bottom zero padding exactly.
    def row_contrib(dy):
        q = jnp.dot(w_ref[dy, 0], cols[0], preferred_element_type=jnp.float32)
        q = q + jnp.dot(w_ref[dy, 1], cols[1], preferred_element_type=jnp.float32)
        q = q + jnp.dot(w_ref[dy, 2], cols[2], preferred_element_type=jnp.float32)
        return q                                             # (Cout, HW) f32

    acc = (_shift_flat(row_contrib(0), W)                    # taps reading row y-1
           + row_contrib(1)                                  # taps reading row y
           + _shift_flat(row_contrib(2), -W)                 # taps reading row y+1
           + b_ref[...])

    # Fused bias + ReLU, single lane-dense store.
    o_ref[0] = jnp.maximum(acc, 0.0)


def rb_forward(x_nchw, p):
    """x_nchw: (N, C, H, W) float32.  p: dict with folded 'w' (3,3,Cout,Cin) and 'b'."""
    N, C, H, W = x_nchw.shape
    Cout = p["w"].shape[2]
    hw = H * W

    # Free (contiguous) reshape in HBM + bf16 cast: halves activation read traffic.
    x_flat = x_nchw.reshape(N, C, hw).astype(jnp.bfloat16)

    kernel = functools.partial(rb_kernel, width=W)
    out_flat = pl.pallas_call(
        kernel,
        out_shape=jax.ShapeDtypeStruct((N, Cout, hw), jnp.float32),
        grid=(N,),
        in_specs=[
            pl.BlockSpec((1, C, hw), lambda n: (n, 0, 0)),          # activation
            pl.BlockSpec((3, 3, Cout, C), lambda n: (0, 0, 0, 0)),  # equiv. 3x3 weight
            pl.BlockSpec((Cout, 1), lambda n: (0, 0)),              # equiv. bias
        ],
        out_specs=pl.BlockSpec((1, Cout, hw), lambda n: (n, 0, 0)),
        compiler_params=pltpu.CompilerParams(
            dimension_semantics=("parallel",)),
    )(x_flat, p["w"], p["b"])

    return out_flat.reshape(N, Cout, H, W)


# ----------------------------------------------------------------------------
# Parameter construction (deterministic, synthetic) + reparameterization fold
# (pure parameter glue, mirrors the module's own get_equivalent_kernel_bias).
# ----------------------------------------------------------------------------
def make_params(key, cin, cout):
    ks = jax.random.split(key, 20)
    nrm = lambda k, s: (0.1 * jax.random.normal(k, s)).astype(jnp.float32)
    pos = lambda k, s: jax.random.uniform(k, s, minval=0.5, maxval=1.5).astype(jnp.float32)

    raw = dict(
        # path_3x3: conv weight OIHW (cout, cin, 3, 3), no bias; BN stats
        w3=nrm(ks[0], (cout, cin, 3, 3)),
        g3=pos(ks[1], (cout,)), be3=nrm(ks[2], (cout,)),
        m3=nrm(ks[3], (cout,)), v3=pos(ks[4], (cout,)),
        # path_1x1.conv1: (cout, cin, 1, 1) + bias; BN stats
        w1a=nrm(ks[5], (cout, cin, 1, 1)), bia=nrm(ks[6], (cout,)),
        g1a=pos(ks[7], (cout,)), be1a=nrm(ks[8], (cout,)),
        m1a=nrm(ks[9], (cout,)), v1a=pos(ks[10], (cout,)),
        # path_1x1.conv2: (cout, cout, 1, 1) + bias; BN stats
        w1b=nrm(ks[11], (cout, cout, 1, 1)), bib=nrm(ks[12], (cout,)),
        g1b=pos(ks[13], (cout,)), be1b=nrm(ks[14], (cout,)),
        m1b=pos(ks[15], (cout,)) - 1.0, v1b=pos(ks[16], (cout,)),
        # path_residual: BN over cin channels (exists since cin==cout, stride==1)
        gr=pos(ks[17], (cin,)), ber=nrm(ks[18], (cin,)),
        mr=nrm(ks[19], (cin,)), vr=pos(ks[0], (cin,)) + 0.1,
    )
    return raw


def fold_params(r):
    """Fold all three eval-mode paths into one equivalent 3x3 kernel + bias.

    Identical math to RB.get_equivalent_kernel_bias / Block1x1.switch_to_deploy,
    done once in f32; the matmul weight is then cast to bf16 for the MXU path.
    """
    cout, cin = r["w1a"].shape[0], r["w1a"].shape[1]

    # path_3x3: BN fold (no conv bias).
    s3 = r["g3"] / jnp.sqrt(r["v3"] + EPS)                              # (cout,)
    w3 = r["w3"] * s3[:, None, None, None]                              # OIHW
    b3 = r["be3"] - r["m3"] * s3

    # path_1x1: each (conv1x1 + bias + BN) is an affine A x + c; compose them.
    s1a = r["g1a"] / jnp.sqrt(r["v1a"] + EPS)
    A1 = r["w1a"][:, :, 0, 0] * s1a[:, None]                            # (cout,cin)
    c1 = (r["bia"] - r["m1a"]) * s1a + r["be1a"]
    s1b = r["g1b"] / jnp.sqrt(r["v1b"] + EPS)
    A2 = r["w1b"][:, :, 0, 0] * s1b[:, None]                            # (cout,cout)
    c2 = (r["bib"] - r["m1b"]) * s1b + r["be1b"]
    A12 = A2 @ A1                                                       # (cout,cin)
    c12 = A2 @ c1 + c2                                                  # (cout,)

    # path_residual: eval BN == identity 3x3 conv (center tap) with scale sr.
    sr = r["gr"] / jnp.sqrt(r["vr"] + EPS)                              # (cin,)
    rbias = r["ber"] - r["mr"] * sr

    # Equivalent kernel in (ky, kx, Cout, Cin) layout + equivalent bias.
    K = jnp.transpose(w3, (2, 3, 0, 1))                                 # (3,3,cout,cin)
    K = K.at[1, 1].add(A12 + jnp.diag(sr))                              # pad 1x1 & id to center
    b = b3 + c12 + rbias

    return dict(w=K.astype(jnp.bfloat16), b=b[:, None].astype(jnp.float32))


# ----------------------------------------------------------------------------
# Pure-JAX reference following the PyTorch forward (eval-mode BN) exactly (f32).
# ----------------------------------------------------------------------------
def rb_reference(x_nchw, r):
    x = jnp.transpose(x_nchw, (0, 2, 3, 1))                             # NHWC

    def conv(inp, w_oihw, padding):
        w_hwio = jnp.transpose(w_oihw, (2, 3, 1, 0))
        return jax.lax.conv_general_dilated(
            inp, w_hwio, (1, 1), padding,
            dimension_numbers=("NHWC", "HWIO", "NHWC"))

    def bn(inp, g, b, m, v):
        return (inp - m) / jnp.sqrt(v + EPS) * g + b

    p3 = bn(conv(x, r["w3"], [(1, 1), (1, 1)]), r["g3"], r["be3"], r["m3"], r["v3"])
    p1 = bn(conv(x, r["w1a"], "VALID") + r["bia"], r["g1a"], r["be1a"], r["m1a"], r["v1a"])
    p1 = bn(conv(p1, r["w1b"], "VALID") + r["bib"], r["g1b"], r["be1b"], r["m1b"], r["v1b"])
    pid = bn(x, r["gr"], r["ber"], r["mr"], r["vr"])
    out = jnp.maximum(p3 + p1 + pid, 0.0)
    return jnp.transpose(out, (0, 3, 1, 2))                             # NCHW


if __name__ == "__main__":
    N, C, H, W = 2, 4, 16, 16     # in_channels == out_channels, stride 1, act=True
    key = jax.random.PRNGKey(0)
    kx, kp = jax.random.split(key)
    x = jax.random.normal(kx, (N, C, H, W), dtype=jnp.float32)

    raw = make_params(kp, C, C)
    folded = fold_params(raw)

    out = jax.block_until_ready(rb_forward(x, folded))
    ref = jax.block_until_ready(rb_reference(x, raw))

    assert out.shape == (N, C, H, W)
    err = float(jnp.max(jnp.abs(out - ref)))
    # bf16 activation/weight path vs f32 three-path reference: bf16-level tolerance.
    assert err < 1e-1, f"mismatch vs reference: max abs err = {err}"
    print("KERNEL_OK")
</pallas_src>

<mosaic_0001>
module attributes {stable_mosaic.version = 11 : i64} {
  func.func @rb_kernel(%arg0: i32, %arg1: memref<1x4x256xbf16, #tpu.memory_space<vmem>>, %arg2: memref<3x3x4x4xbf16, #tpu.memory_space<vmem>>, %arg3: memref<4x1xf32, #tpu.memory_space<vmem>>, %arg4: memref<1x4x256xf32, #tpu.memory_space<vmem>>) attributes {dimension_semantics = [#tpu.dimension_semantics<parallel>], iteration_bounds = array<i64: 2>, scalar_prefetch = 0 : i64, scratch_operands = 0 : i64, tpu.core_type = #tpu.core_type<tc>, window_params = [{transform_indices = @transform_0, window_bounds = array<i64: 1, 4, 256>}, {pipeline_mode = #tpu.pipeline_mode<synchronous>, transform_indices = @transform_1, window_bounds = array<i64: 3, 3, 4, 4>}, {pipeline_mode = #tpu.pipeline_mode<synchronous>, transform_indices = @transform_2, window_bounds = array<i64: 4, 1>}, {transform_indices = @transform_3, window_bounds = array<i64: 1, 4, 256>}]} {
    %c0 = arith.constant 0 : index
    %c0_0 = arith.constant 0 : index
    %c0_1 = arith.constant 0 : index
    %0 = vector.load %arg1[%c0, %c0_0, %c0_1] : memref<1x4x256xbf16, #tpu.memory_space<vmem>>, vector<1x4x256xbf16>
    %1 = vector.shape_cast %0 : vector<1x4x256xbf16> to vector<4x256xbf16>
    %2 = tpu.iota {dimensions = array<i32: 1>} : vector<1x256xi32>
    %c16_i32 = arith.constant 16 : i32
    %c0_i32 = arith.constant 0 : i32
    %3 = arith.cmpi eq, %c16_i32, %c0_i32 : i32
    %c1_i32 = arith.constant 1 : i32
    %4 = arith.select %3, %c1_i32, %c16_i32 : i32
    %5 = vector.broadcast %4 : i32 to vector<1x256xi32>
    %6 = arith.remsi %2, %5 : vector<1x256xi32>
    %c0_i32_2 = arith.constant 0 : i32
    %7 = vector.broadcast %c0_i32_2 : i32 to vector<1x256xi32>
    %8 = arith.cmpi ne, %6, %7 : vector<1x256xi32>
    %c0_i32_3 = arith.constant 0 : i32
    %9 = vector.broadcast %c0_i32_3 : i32 to vector<1x256xi32>
    %10 = arith.cmpi slt, %6, %9 : vector<1x256xi32>
    %c0_i32_4 = arith.constant 0 : i32
    %11 = arith.cmpi slt, %4, %c0_i32_4 : i32
    %12 = vector.broadcast %11 : i1 to vector<1x256xi1>
    %13 = vector.broadcast %12 : vector<1x256xi1> to vector<1x256xi1>
    %14 = arith.xori %10, %13 : vector<1x256xi1>
    %15 = arith.andi %14, %8 : vector<1x256xi1>
    %16 = vector.broadcast %4 : i32 to vector<1x256xi32>
    %17 = arith.addi %6, %16 : vector<1x256xi32>
    %18 = arith.select %15, %17, %6 : vector<1x256xi1>, vector<1x256xi32>
    %c1_i32_5 = arith.constant 1 : i32
    %19 = vector.broadcast %c1_i32_5 : i32 to vector<1x256xi32>
    %20 = arith.cmpi sge, %18, %19 : vector<1x256xi32>
    %21 = arith.extui %20 : vector<1x256xi1> to vector<1x256xi32>
    %22 = arith.sitofp %21 : vector<1x256xi32> to vector<1x256xf32>
    %23 = arith.truncf %22 : vector<1x256xf32> to vector<1x256xbf16>
    %c14_i32 = arith.constant 14 : i32
    %24 = vector.broadcast %c14_i32 : i32 to vector<1x256xi32>
    %25 = arith.cmpi sle, %18, %24 : vector<1x256xi32>
    %26 = arith.extui %25 : vector<1x256xi1> to vector<1x256xi32>
    %27 = arith.sitofp %26 : vector<1x256xi32> to vector<1x256xf32>
    %28 = arith.truncf %27 : vector<1x256xf32> to vector<1x256xbf16>
    %cst = arith.constant 0.000000e+00 : bf16
    %29 = vector.broadcast %cst : bf16 to vector<4x1xbf16>
    %30 = vector.extract_strided_slice %1 {offsets = [0, 0], sizes = [4, 255], strides = [1, 1]} : vector<4x256xbf16> to vector<4x255xbf16>
    %31 = tpu.concatenate %29, %30 in 1 : vector<4x1xbf16>, vector<4x255xbf16> -> vector<4x256xbf16>
    %32 = vector.broadcast %23 : vector<1x256xbf16> to vector<4x256xbf16>
    %33 = arith.mulf %31, %32 : vector<4x256xbf16>
    %cst_6 = arith.constant 0.000000e+00 : bf16
    %34 = vector.broadcast %cst_6 : bf16 to vector<4x1xbf16>
    %35 = vector.extract_strided_slice %1 {offsets = [0, 1], sizes = [4, 255], strides = [1, 1]} : vector<4x256xbf16> to vector<4x255xbf16>
    %36 = tpu.concatenate %35, %34 in 1 : vector<4x255xbf16>, vector<4x1xbf16> -> vector<4x256xbf16>
    %37 = vector.broadcast %28 : vector<1x256xbf16> to vector<4x256xbf16>
    %38 = arith.mulf %36, %37 : vector<4x256xbf16>
    %c0_7 = arith.constant 0 : index
    %c0_8 = arith.constant 0 : index
    %c0_9 = arith.constant 0 : index
    %c0_10 = arith.constant 0 : index
    %39 = vector.load %arg2[%c0_7, %c0_8, %c0_9, %c0_10] : memref<3x3x4x4xbf16, #tpu.memory_space<vmem>>, vector<1x1x4x4xbf16>
    %40 = vector.shape_cast %39 : vector<1x1x4x4xbf16> to vector<4x4xbf16>
    %cst_11 = arith.constant dense<0.000000e+00> : vector<4x256xf32>
    %41 = tpu.matmul %40, %33, %cst_11 {dimension_numbers = #tpu.dot_dimension_numbers<[1], [0], [0], [1], [0, 0, 1, 1], [], []>} : vector<4x4xbf16>, vector<4x256xbf16>, vector<4x256xf32> -> vector<4x256xf32>
    %c0_12 = arith.constant 0 : index
    %c1 = arith.constant 1 : index
    %c0_13 = arith.constant 0 : index
    %c0_14 = arith.constant 0 : index
    %42 = vector.load %arg2[%c0_12, %c1, %c0_13, %c0_14] : memref<3x3x4x4xbf16, #tpu.memory_space<vmem>>, vector<1x1x4x4xbf16>
    %43 = vector.shape_cast %42 : vector<1x1x4x4xbf16> to vector<4x4xbf16>
    %cst_15 = arith.constant dense<0.000000e+00> : vector<4x256xf32>
    %44 = tpu.matmul %43, %1, %cst_15 {dimension_numbers = #tpu.dot_dimension_numbers<[1], [0], [0], [1], [0, 0, 1, 1], [], []>} : vector<4x4xbf16>, vector<4x256xbf16>, vector<4x256xf32> -> vector<4x256xf32>
    %45 = arith.addf %41, %44 : vector<4x256xf32>
    %c0_16 = arith.constant 0 : index
    %c2 = arith.constant 2 : index
    %c0_17 = arith.constant 0 : index
    %c0_18 = arith.constant 0 : index
    %46 = vector.load %arg2[%c0_16, %c2, %c0_17, %c0_18] : memref<3x3x4x4xbf16, #tpu.memory_space<vmem>>, vector<1x1x4x4xbf16>
    %47 = vector.shape_cast %46 : vector<1x1x4x4xbf16> to vector<4x4xbf16>
    %cst_19 = arith.constant dense<0.000000e+00> : vector<4x256xf32>
    %48 = tpu.matmul %47, %38, %cst_19 {dimension_numbers = #tpu.dot_dimension_numbers<[1], [0], [0], [1], [0, 0, 1, 1], [], []>} : vector<4x4xbf16>, vector<4x256xbf16>, vector<4x256xf32> -> vector<4x256xf32>
    %49 = arith.addf %45, %48 : vector<4x256xf32>
    %cst_20 = arith.constant 0.000000e+00 : f32
    %50 = vector.broadcast %cst_20 : f32 to vector<4x16xf32>
    %51 = vector.extract_strided_slice %49 {offsets = [0, 0], sizes = [4, 240], strides = [1, 1]} : vector<4x256xf32> to vector<4x240xf32>
    %52 = tpu.concatenate %50, %51 in 1 : vector<4x16xf32>, vector<4x240xf32> -> vector<4x256xf32>
    %c1_21 = arith.constant 1 : index
    %c0_22 = arith.constant 0 : index
    %c0_23 = arith.constant 0 : index
    %c0_24 = arith.constant 0 : index
    %53 = vector.load %arg2[%c1_21, %c0_22, %c0_23, %c0_24] : memref<3x3x4x4xbf16, #tpu.memory_space<vmem>>, vector<1x1x4x4xbf16>
    %54 = vector.shape_cast %53 : vector<1x1x4x4xbf16> to vector<4x4xbf16>
    %cst_25 = arith.constant dense<0.000000e+00> : vector<4x256xf32>
    %55 = tpu.matmul %54, %33, %cst_25 {dimension_numbers = #tpu.dot_dimension_numbers<[1], [0], [0], [1], [0, 0, 1, 1], [], []>} : vector<4x4xbf16>, vector<4x256xbf16>, vector<4x256xf32> -> vector<4x256xf32>
    %c1_26 = arith.constant 1 : index
    %c1_27 = arith.constant 1 : index
    %c0_28 = arith.constant 0 : index
    %c0_29 = arith.constant 0 : index
    %56 = vector.load %arg2[%c1_26, %c1_27, %c0_28, %c0_29] : memref<3x3x4x4xbf16, #tpu.memory_space<vmem>>, vector<1x1x4x4xbf16>
    %57 = vector.shape_cast %56 : vector<1x1x4x4xbf16> to vector<4x4xbf16>
    %cst_30 = arith.constant dense<0.000000e+00> : vector<4x256xf32>
    %58 = tpu.matmul %57, %1, %cst_30 {dimension_numbers = #tpu.dot_dimension_numbers<[1], [0], [0], [1], [0, 0, 1, 1], [], []>} : vector<4x4xbf16>, vector<4x256xbf16>, vector<4x256xf32> -> vector<4x256xf32>
    %59 = arith.addf %55, %58 : vector<4x256xf32>
    %c1_31 = arith.constant 1 : index
    %c2_32 = arith.constant 2 : index
    %c0_33 = arith.constant 0 : index
    %c0_34 = arith.constant 0 : index
    %60 = vector.load %arg2[%c1_31, %c2_32, %c0_33, %c0_34] : memref<3x3x4x4xbf16, #tpu.memory_space<vmem>>, vector<1x1x4x4xbf16>
    %61 = vector.shape_cast %60 : vector<1x1x4x4xbf16> to vector<4x4xbf16>
    %cst_35 = arith.constant dense<0.000000e+00> : vector<4x256xf32>
    %62 = tpu.matmul %61, %38, %cst_35 {dimension_numbers = #tpu.dot_dimension_numbers<[1], [0], [0], [1], [0, 0, 1, 1], [], []>} : vector<4x4xbf16>, vector<4x256xbf16>, vector<4x256xf32> -> vector<4x256xf32>
    %63 = arith.addf %59, %62 : vector<4x256xf32>
    %64 = arith.addf %52, %63 : vector<4x256xf32>
    %c2_36 = arith.constant 2 : index
    %c0_37 = arith.constant 0 : index
    %c0_38 = arith.constant 0 : index
    %c0_39 = arith.constant 0 : index
    %65 = vector.load %arg2[%c2_36, %c0_37, %c0_38, %c0_39] : memref<3x3x4x4xbf16, #tpu.memory_space<vmem>>, vector<1x1x4x4xbf16>
    %66 = vector.shape_cast %65 : vector<1x1x4x4xbf16> to vector<4x4xbf16>
    %cst_40 = arith.constant dense<0.000000e+00> : vector<4x256xf32>
    %67 = tpu.matmul %66, %33, %cst_40 {dimension_numbers = #tpu.dot_dimension_numbers<[1], [0], [0], [1], [0, 0, 1, 1], [], []>} : vector<4x4xbf16>, vector<4x256xbf16>, vector<4x256xf32> -> vector<4x256xf32>
    %c2_41 = arith.constant 2 : index
    %c1_42 = arith.constant 1 : index
    %c0_43 = arith.constant 0 : index
    %c0_44 = arith.constant 0 : index
    %68 = vector.load %arg2[%c2_41, %c1_42, %c0_43, %c0_44] : memref<3x3x4x4xbf16, #tpu.memory_space<vmem>>, vector<1x1x4x4xbf16>
    %69 = vector.shape_cast %68 : vector<1x1x4x4xbf16> to vector<4x4xbf16>
    %cst_45 = arith.constant dense<0.000000e+00> : vector<4x256xf32>
    %70 = tpu.matmul %69, %1, %cst_45 {dimension_numbers = #tpu.dot_dimension_numbers<[1], [0], [0], [1], [0, 0, 1, 1], [], []>} : vector<4x4xbf16>, vector<4x256xbf16>, vector<4x256xf32> -> vector<4x256xf32>
    %71 = arith.addf %67, %70 : vector<4x256xf32>
    %c2_46 = arith.constant 2 : index
    %c2_47 = arith.constant 2 : index
    %c0_48 = arith.constant 0 : index
    %c0_49 = arith.constant 0 : index
    %72 = vector.load %arg2[%c2_46, %c2_47, %c0_48, %c0_49] : memref<3x3x4x4xbf16, #tpu.memory_space<vmem>>, vector<1x1x4x4xbf16>
    %73 = vector.shape_cast %72 : vector<1x1x4x4xbf16> to vector<4x4xbf16>
    %cst_50 = arith.constant dense<0.000000e+00> : vector<4x256xf32>
    %74 = tpu.matmul %73, %38, %cst_50 {dimension_numbers = #tpu.dot_dimension_numbers<[1], [0], [0], [1], [0, 0, 1, 1], [], []>} : vector<4x4xbf16>, vector<4x256xbf16>, vector<4x256xf32> -> vector<4x256xf32>
    %75 = arith.addf %71, %74 : vector<4x256xf32>
    %cst_51 = arith.constant 0.000000e+00 : f32
    %76 = vector.broadcast %cst_51 : f32 to vector<4x16xf32>
    %77 = vector.extract_strided_slice %75 {offsets = [0, 16], sizes = [4, 240], strides = [1, 1]} : vector<4x256xf32> to vector<4x240xf32>
    %78 = tpu.concatenate %77, %76 in 1 : vector<4x240xf32>, vector<4x16xf32> -> vector<4x256xf32>
    %79 = arith.addf %64, %78 : vector<4x256xf32>
    %c0_52 = arith.constant 0 : index
    %c0_53 = arith.constant 0 : index
    %80 = vector.load %arg3[%c0_52, %c0_53] : memref<4x1xf32, #tpu.memory_space<vmem>>, vector<4x1xf32>
    %81 = vector.broadcast %80 : vector<4x1xf32> to vector<4x256xf32>
    %82 = arith.addf %79, %81 : vector<4x256xf32>
    %cst_54 = arith.constant 0.000000e+00 : f32
    %83 = vector.broadcast %cst_54 : f32 to vector<4x256xf32>
    %84 = arith.maximumf %82, %83 : vector<4x256xf32>
    %c0_55 = arith.constant 0 : index
    %c0_56 = arith.constant 0 : index
    %c0_57 = arith.constant 0 : index
    %85 = vector.load %arg4[%c0_55, %c0_56, %c0_57] : memref<1x4x256xf32, #tpu.memory_space<vmem>>, vector<1x4x256xf32>
    %86 = vector.shape_cast %85 : vector<1x4x256xf32> to vector<4x256xf32>
    %87 = vector.shape_cast %84 : vector<4x256xf32> to vector<1x4x256xf32>
    tpu.vector_store %arg4[%c0_55, %c0_56, %c0_57], %87 {strides = array<i32>} : memref<1x4x256xf32, #tpu.memory_space<vmem>>, vector<1x4x256xf32>,
    return
  }
  func.func @transform_0(%arg0: i32) -> (i32, i32, i32) {
    %c0_i32 = arith.constant 0 : i32
    %c0_i32_0 = arith.constant 0 : i32
    %c0_i32_1 = arith.constant 0 : i32
    return %arg0, %c0_i32, %c0_i32_0 : i32, i32, i32
  }
  func.func @transform_1(%arg0: i32) -> (i32, i32, i32, i32) {
    %c0_i32 = arith.constant 0 : i32
    %c0_i32_0 = arith.constant 0 : i32
    %c0_i32_1 = arith.constant 0 : i32
    %c0_i32_2 = arith.constant 0 : i32
    %c0_i32_3 = arith.constant 0 : i32
    return %c0_i32, %c0_i32_0, %c0_i32_1, %c0_i32_2 : i32, i32, i32, i32
  }
  func.func @transform_2(%arg0: i32) -> (i32, i32) {
    %c0_i32 = arith.constant 0 : i32
    %c0_i32_0 = arith.constant 0 : i32
    %c0_i32_1 = arith.constant 0 : i32
    return %c0_i32, %c0_i32_0 : i32, i32
  }
  func.func @transform_3(%arg0: i32) -> (i32, i32, i32) {
    %c0_i32 = arith.constant 0 : i32
    %c0_i32_0 = arith.constant 0 : i32
    %c0_i32_1 = arith.constant 0 : i32
    return %arg0, %c0_i32, %c0_i32_0 : i32, i32, i32
  }
}

</mosaic_0001>

<llo_original>
// kernel: tpu_custom_call.1
$region0: #{tpu_custom_call.1}
  #allocation0 [shape = 'u32[]', space=smem, size = 0x4, offset = 0x4, fixed_abs, tag = 'smem constant byte address 0x4 - core index']
  #allocation1 [shape = 'u32[144,128]{1,0:T(1,128)}', space=vmem, size = 0x12000, scoped, tag = 'internal scratch']
  %s0 = inlined_call_operand.hbm [shape: bf16[2,4,256], index: 0, kind: input, shape index: {}]
  %s1 = inlined_call_operand.hbm [shape: bf16[3,3,4,4], index: 1, kind: input, shape index: {}]
  %s2 = inlined_call_operand.vmem [shape: f32[4,1], index: 2, kind: input, shape index: {}]
  %s3 = inlined_call_operand.hbm [shape: f32[2,4,256], index: 3, kind: output, shape index: {}]
  %s4 = sld [smem:[#allocation0]]
  $region53: #{tpu_custom_call.1} parent=0
    _
  %s6 = ssub.s32 1, %s4
  %s7 = scalar_select 0, %s6, %s4
  $region1: #{tpu_custom_call.1} parent=0
    #allocation2 [shape = 'u8[4096]{0}', space=vmem, size = 0x1000, scoped, tag = 'input window, operand 0']
    #allocation3 [shape = 's32[2]{0}', space=sflag, size = 0x8, scoped, tag = 'scoped memory for tpu_custom_call.1']
    #allocation4 [shape = 's32[2]{0}', space=sflag, size = 0x8, scoped, tag = 'scoped memory for tpu_custom_call.1']
    #allocation5 [shape = 'u8[9216]{0}', space=vmem, size = 0x2400, scoped, tag = 'input window, operand 1, single buffered']
    #allocation6 [shape = 's32[1]{0}', space=sflag, size = 0x4, scoped, tag = 'scoped memory for tpu_custom_call.1']
    #allocation7 [shape = 'u8[8192]{0}', space=vmem, size = 0x2000, scoped, tag = 'output window, operand 0']
    %8 = vsyncpa [#allocation3], 0
    %s9 = scalar_lea.sflag [#allocation3], 1
    %10 = vsyncpa %s9, 0
    %11 = vsyncpa [#allocation6], 0
    %12 = vsyncpa [#allocation4], 0
    %s13 = scalar_lea.sflag [#allocation4], 1
    %14 = vsyncpa %s13, 0
    loop: start=0, step=1, limit=4
    $region2: #{tpu_custom_call.1} parent=1 // loop_pre_header
      _
    $region3: #{tpu_custom_call.1} parent=1 // loop_header
      %s16 = sphi 0, %s20
      %p17 = scmp.ge.s32.totalorder %s16, 4
      %s26 = sphi 0, %s28
      %s29 = sphi 0, %s26
      %s30 = sphi 0, %s29
      %s46 = sphi 0, %s30
      %s50 = sphi 0, %s50
      %s52 = sphi 0, %s50
      %s53 = sphi 0, %s52
      %s67 = sphi 0, %s53
      %s71 = sphi 0, %s71
      %s73 = sphi 0, %s71
      %s74 = sphi 0, %s73
      %s88 = sphi 0, %s74
      %s94 = sphi 0, %s96
      %s97 = sphi 0, %s94
      %s98 = sphi 0, %s97
      %s114 = sphi 0, %s98
    $region4: #{tpu_custom_call.1} parent=1 // loop_header_branch
      %19 = sbr.rel (%p17) target = $region8
    $region5: #{tpu_custom_call.1} parent=1 // loop_body
      %s21 = ssub.s32 %s16, 1
      %s22 = ssub.s32 %s16, 2
      %s23 = sadd.s32 %s16, 1
      %s24 = ssub.s32 %s16, %s23
      %p25 = scmp.eq.s32.totalorder %s24, 0
      %s27 = sadd.s32 %s26, 1
      %s28 = scalar_select %p25, %s26, %s27
      %p31 = pneg %p25
      %p32 = scmp.eq.s32.totalorder %s16, 1
      %p33 = por %p31, %p32
      %p34 = scmp.ne.s32.totalorder %s26, %s29
      %p35 = scmp.eq.s32.totalorder %s16, 0
      %p36 = por %p34, %p35
      %p37 = scmp.ne.s32.totalorder %s26, %s29
      %p38 = scmp.eq.s32.totalorder %s21, 1
      %p39 = por %p37, %p38
      %p40 = scmp.ne.s32.totalorder %s29, %s30
      %p41 = scmp.eq.s32.totalorder %s21, 0
      %p42 = por %p40, %p41
      %p43 = scmp.ne.s32.totalorder %s29, %s30
      %p44 = scmp.eq.s32.totalorder %s22, 1
      %p45 = por %p43, %p44
      %p47 = scmp.ne.s32.totalorder %s30, %s46
      %p48 = scmp.eq.s32.totalorder %s22, 0
      %p49 = por %p47, %p48
      %s51 = sadd.s32 %s50, 1
      %p54 = scmp.eq.s32.totalorder %s16, 1
      %p55 = scmp.ne.s32.totalorder %s50, %s52
      %p56 = scmp.eq.s32.totalorder %s16, 0
      %p57 = por %p55, %p56
      %p58 = scmp.ne.s32.totalorder %s50, %s52
      %p59 = scmp.eq.s32.totalorder %s21, 1
      %p60 = por %p58, %p59
      %p61 = scmp.ne.s32.totalorder %s52, %s53
      %p62 = scmp.eq.s32.totalorder %s21, 0
      %p63 = por %p61, %p62
      %p64 = scmp.ne.s32.totalorder %s52, %s53
      %p65 = scmp.eq.s32.totalorder %s22, 1
      %p66 = por %p64, %p65
      %p68 = scmp.ne.s32.totalorder %s53, %s67
      %p69 = scmp.eq.s32.totalorder %s22, 0
      %p70 = por %p68, %p69
      %s72 = sadd.s32 %s71, 1
      %p75 = scmp.eq.s32.totalorder %s16, 1
      %p76 = scmp.ne.s32.totalorder %s71, %s73
      %p77 = scmp.eq.s32.totalorder %s16, 0
      %p78 = por %p76, %p77
      %p79 = scmp.ne.s32.totalorder %s71, %s73
      %p80 = scmp.eq.s32.totalorder %s21, 1
      %p81 = por %p79, %p80
      %p82 = scmp.ne.s32.totalorder %s73, %s74
      %p83 = scmp.eq.s32.totalorder %s21, 0
      %p84 = por %p82, %p83
      %p85 = scmp.ne.s32.totalorder %s73, %s74
      %p86 = scmp.eq.s32.totalorder %s22, 1
      %p87 = por %p85, %p86
      %p89 = scmp.ne.s32.totalorder %s74, %s88
      %p90 = scmp.eq.s32.totalorder %s22, 0
      %p91 = por %p89, %p90
      %s92 = ssub.s32 %s16, %s23
      %p93 = scmp.eq.s32.totalorder %s92, 0
      %s95 = sadd.s32 %s94, 1
      %s96 = scalar_select %p93, %s94, %s95
      %p99 = pneg %p93
      %p100 = scmp.eq.s32.totalorder %s16, 1
      %p101 = por %p99, %p100
      %p102 = scmp.ne.s32.totalorder %s94, %s97
      %p103 = scmp.eq.s32.totalorder %s16, 0
      %p104 = por %p102, %p103
      %p105 = scmp.ne.s32.totalorder %s94, %s97
      %p106 = scmp.eq.s32.totalorder %s21, 1
      %p107 = por %p105, %p106
      %p108 = scmp.ne.s32.totalorder %s97, %s98
      %p109 = scmp.eq.s32.totalorder %s21, 0
      %p110 = por %p108, %p109
      %p111 = scmp.ne.s32.totalorder %s97, %s98
      %p112 = scmp.eq.s32.totalorder %s22, 1
      %p113 = por %p111, %p112
      %p115 = scmp.ne.s32.totalorder %s98, %s114
      %p116 = scmp.eq.s32.totalorder %s22, 0
      %p117 = por %p115, %p116
      %p118 = scmp.le.s32.totalorder 1, %s16
      %p119 = scmp.lt.s32.totalorder %s16, 3
      %p120 = pnand %p118, %p119
      %p121 = pneg %p120
      // Predicated region
      $region9: #{tpu_custom_call.1} parent=5 // pred_check
        _
      $region10: #{tpu_custom_call.1} parent=5 // pred_check_branch
        %123 = sbr.rel (%p120) target = $region12
      $region11: #{tpu_custom_call.1} parent=5 // pred_region
        %s124 = ssub.s32 %s16, 1
        // Predicated region
        $region13: #{tpu_custom_call.1} parent=11 // pred_check
          %p125 = pneg %p63
        $region14: #{tpu_custom_call.1} parent=11 // pred_check_branch
          %127 = sbr.rel (%p125) target = $region16
        $region15: #{tpu_custom_call.1} parent=11 // pred_region
          %s129 = ssub.s32 288, 288
          %130 = vsyncadd [#allocation6], %s129
          %s131 = sshll.u32 [#allocation5], 4
          %s132 = int_to_ptr.vmem [resolvable:$true] %s131
          %137 = dma.hbm_to_vmem [thread:$0]  %s1, 288, %s132, [#allocation6], 32, 32, 2
        $region16: #{tpu_custom_call.1} parent=11 // pred_fallthru
          _
        // Predicated region
        $region17: #{tpu_custom_call.1} parent=11 // pred_check
          %p138 = pneg %p84
        $region18: #{tpu_custom_call.1} parent=11 // pred_check_branch
          %140 = sbr.rel (%p138) target = $region20
        $region19: #{tpu_custom_call.1} parent=11 // pred_region
          _
        $region20: #{tpu_custom_call.1} parent=11 // pred_fallthru
          _
      $region12: #{tpu_custom_call.1} parent=5 // pred_fallthru
        _
      %p141 = scmp.lt.s32.totalorder %s16, 2
      // Predicated region
      $region21: #{tpu_custom_call.1} parent=5 // pred_check
        %p142 = pneg %p141
      $region22: #{tpu_custom_call.1} parent=5 // pred_check_branch
        %144 = sbr.rel (%p142) target = $region24
      $region23: #{tpu_custom_call.1} parent=5 // pred_region
        // Predicated region
        $region25: #{tpu_custom_call.1} parent=23 // pred_check
          %p145 = pneg %p36
        $region26: #{tpu_custom_call.1} parent=23 // pred_check_branch
          %147 = sbr.rel (%p145) target = $region28
        $region27: #{tpu_custom_call.1} parent=23 // pred_region
          %s148 = sand.u32 %s26, 1
          %s149 = scalar_lea.sflag [#allocation3], %s148
          %s150 = sand.u32 %s26, 1
          %s151 = smul.addr %s150, 4
          %s152 = scalar_lea.vmem [#allocation2], %s151
          %s154 = ssub.s32 64, 64
          %155 = vsyncadd %s149, %s154
          %s156 = smul.addr %s16, 2
          %s157 = smul.addr %s156, 32
          %s158 = scalar_lea.hbm %s0, %s157
          %s160 = sshll.u32 %s152, 4
          %s161 = int_to_ptr.vmem [resolvable:$true] %s160
          %163 = dma.hbm_to_vmem [thread:$0]  %s158, 64, %s161, %s149
        $region28: #{tpu_custom_call.1} parent=23 // pred_fallthru
          _
      $region24: #{tpu_custom_call.1} parent=5 // pred_fallthru
        _
      %p164 = scmp.le.s32.totalorder 1, %s16
      %p165 = scmp.lt.s32.totalorder %s16, 3
      %p166 = pnand %p164, %p165
      %p167 = pneg %p166
      // Predicated region
      $region29: #{tpu_custom_call.1} parent=5 // pred_check
        _
      $region30: #{tpu_custom_call.1} parent=5 // pred_check_branch
        %169 = sbr.rel (%p166) target = $region32
      $region31: #{tpu_custom_call.1} parent=5 // pred_region
        %s170 = ssub.s32 %s16, 1
        %s171 = sand.u32 %s29, 1
        %s172 = scalar_lea.sflag [#allocation3], %s171
        %s173 = sand.u32 %s29, 1
        %s174 = smul.addr %s173, 4
        %s175 = scalar_lea.vmem [#allocation2], %s174
        // Predicated region
        $region33: #{tpu_custom_call.1} parent=31 // pred_check
          %p176 = pneg %p42
        $region34: #{tpu_custom_call.1} parent=31 // pred_check_branch
          %178 = sbr.rel (%p176) target = $region36
        $region35: #{tpu_custom_call.1} parent=31 // pred_region
          %179 = dma.done %s172, 64
        $region36: #{tpu_custom_call.1} parent=31 // pred_fallthru
          _
        // Predicated region
        $region37: #{tpu_custom_call.1} parent=31 // pred_check
          %p180 = pneg %p63
        $region38: #{tpu_custom_call.1} parent=31 // pred_check_branch
          %182 = sbr.rel (%p180) target = $region40
        $region39: #{tpu_custom_call.1} parent=31 // pred_region
          %183 = dma.done [#allocation6], 288
        $region40: #{tpu_custom_call.1} parent=31 // pred_fallthru
          _
        %s184 = sand.u32 %s29, 1
        %s185 = scalar_lea.sflag [#allocation3], %s184
        %s186 = sand.u32 %s29, 1
        %s187 = smul.addr %s186, 4
        %s188 = scalar_lea.vmem [#allocation2], %s187
        %p189 = pneg %p42
        %p190 = pneg %p39
        %p191 = pneg %p63
        %p192 = pneg %p60
        %p193 = pneg %p84
        %p194 = pneg %p81
        %p195 = pneg %p110
        %p196 = pneg %p107
        %s197 = sand.u32 %s97, 1
        %s198 = scalar_lea.sflag [#allocation4], %s197
        %s199 = sand.u32 %s97, 1
        %s200 = smul.addr %s199, 8
        %s201 = scalar_lea.vmem [#allocation7], %s200
        %v203 = vld [vmem:[%s175] sm:$0xf]
        %v204 = vlaneseq
        %v205 = vand.u32 %v204, 127
        %v206 = vadd.s32 %v205, 128
        %vm207 = vcmp.lt.s32.totalorder %v205, 0
        %v208 = vsub.s32 0, %v205
        %v209 = vsel %vm207, %v208, %v205
        %v210 = vshrl.u32 %v209, 4
        %v211 = vand.u32 %v209, 15
        %v212 = vsub.s32 0, %v211
        %v213 = vsel %vm207, %v212, %v211
        %vm214 = vcmp.lt.s32.totalorder %v206, 0
        %v215 = vsub.s32 0, %v206
        %v216 = vsel %vm214, %v215, %v206
        %v217 = vshrl.u32 %v216, 4
        %v218 = vand.u32 %v216, 15
        %v219 = vsub.s32 0, %v218
        %v220 = vsel %vm214, %v219, %v218
        %vm221 = vcmp.ne.s32.totalorder %v213, 0
        %vm222 = vcmp.ne.s32.totalorder %v220, 0
        %vm223 = vcmp.lt.s32.totalorder %v213, 0
        %vm224 = vcmp.lt.s32.totalorder %v220, 0
        %vm225 = vmand %vm223, %vm221
        %vm226 = vmand %vm224, %vm222
        %v227 = vadd.s32 %v213, 16
        %v228 = vadd.s32 %v220, 16
        %v229 = vsel %vm225, %v227, %v213
        %v230 = vsel %vm226, %v228, %v220
        %vm231 = vcmp.ge.s32.totalorder %v229, 1
        %vm232 = vcmp.ge.s32.totalorder %v230, 1
        %v233 = vsel %vm231, 1, 0
        %v234 = vsel %vm232, 1, 0
        %v235 = vcvt.s32.f32 %v233
        %v236 = vcvt.s32.f32 %v234
        %v237 = vpack.c.bf16 %v235, %v235
        %v238 = vpack.c.bf16 %v236, %v236
        %vm239 = vcmp.le.s32.totalorder %v229, 14
        %vm240 = vcmp.le.s32.totalorder %v230, 14
        %v241 = vsel %vm239, 1, 0
        %v242 = vsel %vm240, 1, 0
        %v243 = vcvt.s32.f32 %v241
        %v244 = vcvt.s32.f32 %v242
        %v245 = vpack.c.bf16 %v243, %v243
        %v246 = vpack.c.bf16 %v244, %v244
        %v249 = vunpack.c.l.s4 1983009808
        %v250 = vunpack.c.0.s8 %v249
        %v251 = vlaneseq
        %v252 = vshrl.u32 %v251, 7
        %v253 = vsub.s32 %v250, %v252
        %v254 = vrot.slane %v203, %v253
        %v255 = vcombine.high %v254, %v254
        %256 = vrot.lane.b32.xlu0 %v254, 1
        %v257 = vpop.permute.xlu0 %256
        %258 = vrot.lane.b32.xlu0 %v255, 1
        %v259 = vpop.permute.xlu0 %258
        %vm260 = vcmask 7168
        %v261 = vsel %vm260, %v257, %v259
        %vm263 = vcmask 7168
        %v266 = vsel %vm263, 0, %v257
        %v268 = vmul.bf16 %v266, %v237
        %v269 = vmul.bf16 %v261, %v238
        %270 = vrot.lane.b32.xlu0 %v254, 127
        %v271 = vpop.permute.xlu0 %270
        %272 = vrot.lane.b32.xlu0 %v255, 127
        %v273 = vpop.permute.xlu0 %272
        %vm274 = vcmask 1039360
        %v275 = vsel %vm274, %v271, %v273
        %vm277 = vcmask 1039360
        %v279 = vsel %vm277, %v273, 0
        %v281 = vmul.bf16 %v275, %v245
        %v282 = vmul.bf16 %v279, %v246
        %v283 = vld [vmem:[#allocation5] sm:$0x3]
        %s284 = scalar_lea.vmem [#allocation5], 2
        %v285 = vld [vmem:[%s284] sm:$0x3]
        %vm286 = vcmask 31744
        %v288 = vsel %vm286, %v285, 0
        %vm290 = vcmask 1041408
        %v292 = vsel %vm290, %v254, 0
        %v295 = vsel %vm290, %v255, 0
        %297 = vmatprep.subr.bf16.mxu0 %v295
        %298 = vmatpush1.bf16.msra.mxu0 %v292
        %299 = vmatprep.subr.bf16.mxu0 0
        %300 = vmatpush1.bf16.msra.mxu0 0
        %301 = vmatprep.subr.bf16.mxu0 0
        %302 = vmatpush1.bf16.msra.mxu0 0
        %303 = vmatprep.subr.bf16.mxu0 0
        %304 = vmatpush1.bf16.msra.mxu0 0
        %305 = vmatprep.subr.bf16.mxu0 0
        %306 = vmatpush1.bf16.msra.mxu0 0
        %307 = vmatprep.subr.bf16.mxu0 0
        %308 = vmatpush1.bf16.msra.mxu0 0
        %309 = vmatprep.subr.bf16.mxu0 0
        %310 = vmatpush1.bf16.msra.mxu0 0
        %311 = vmatprep.subr.bf16.mxu0 0
        %312 = vmatpush1.bf16.msra.mxu0 0
        %313 = vmatprep.subr.bf16.mxu0 0
        %314 = vmatpush1.bf16.msra.mxu0 0
        %315 = vmatprep.subr.bf16.mxu0 0
        %316 = vmatpush1.bf16.msra.mxu0 0
        %317 = vmatprep.subr.bf16.mxu0 0
        %318 = vmatpush1.bf16.msra.mxu0 0
        %319 = vmatprep.subr.bf16.mxu0 0
        %320 = vmatpush1.bf16.msra.mxu0 0
        %321 = vmatprep.subr.bf16.mxu0 0
        %322 = vmatpush1.bf16.msra.mxu0 0
        %323 = vmatprep.subr.bf16.mxu0 0
        %324 = vmatpush1.bf16.msra.mxu0 0
        %325 = vmatprep.subr.bf16.mxu0 0
        %326 = vmatpush1.bf16.msra.mxu0 0
        %327 = vmatprep.subr.bf16.mxu0 0
        %328 = vmatpush1.bf16.msra.mxu0 0
        %329 = vmatprep.mubr.bf16.mxu0 0
        %330 = vmatmul.mubr.bf16.gmra.mrb[0].mxu0 %v288
        %v331 = vpop.f32.mrb[0].mxu0
        %v332 = vadd.f32 0.0, %v331
        %v333 = vpop.f32.mrb[0].mxu0
        %v334 = vadd.f32 0.0, %v333
        %v335 = vpop.f32.mrb[0].mxu0
        %v336 = vpop.f32.mrb[0].mxu0
        %337 = vdwg.mxu0
        %v339 = vsel %vm286, %v283, 0
        %v342 = vsel %vm290, %v268, 0
        %v345 = vsel %vm290, %v269, 0
        %347 = vmatprep.subr.bf16.mxu0 %v345
        %348 = vmatpush1.bf16.msra.mxu0 %v342
        %349 = vmatprep.subr.bf16.mxu0 0
        %350 = vmatpush1.bf16.msra.mxu0 0
        %351 = vmatprep.subr.bf16.mxu0 0
        %352 = vmatpush1.bf16.msra.mxu0 0
        %353 = vmatprep.subr.bf16.mxu0 0
        %354 = vmatpush1.bf16.msra.mxu0 0
        %355 = vmatprep.subr.bf16.mxu0 0
        %356 = vmatpush1.bf16.msra.mxu0 0
        %357 = vmatprep.subr.bf16.mxu0 0
        %358 = vmatpush1.bf16.msra.mxu0 0
        %359 = vmatprep.subr.bf16.mxu0 0
        %360 = vmatpush1.bf16.msra.mxu0 0
        %361 = vmatprep.subr.bf16.mxu0 0
        %362 = vmatpush1.bf16.msra.mxu0 0
        %363 = vmatprep.subr.bf16.mxu0 0
        %364 = vmatpush1.bf16.msra.mxu0 0
        %365 = vmatprep.subr.bf16.mxu0 0
        %366 = vmatpush1.bf16.msra.mxu0 0
        %367 = vmatprep.subr.bf16.mxu0 0
        %368 = vmatpush1.bf16.msra.mxu0 0
        %369 = vmatprep.subr.bf16.mxu0 0
        %370 = vmatpush1.bf16.msra.mxu0 0
        %371 = vmatprep.subr.bf16.mxu0 0
        %372 = vmatpush1.bf16.msra.mxu0 0
        %373 = vmatprep.subr.bf16.mxu0 0
        %374 = vmatpush1.bf16.msra.mxu0 0
        %375 = vmatprep.subr.bf16.mxu0 0
        %376 = vmatpush1.bf16.msra.mxu0 0
        %377 = vmatprep.subr.bf16.mxu0 0
        %378 = vmatpush1.bf16.msra.mxu0 0
        %379 = vmatprep.mubr.bf16.mxu0 0
        %380 = vmatmul.mubr.bf16.gmra.mrb[0].mxu0 %v339
        %v381 = vpop.f32.mrb[0].mxu0
        %v382 = vadd.f32 %v332, %v381
        %v383 = vpop.f32.mrb[0].mxu0
        %v384 = vadd.f32 %v334, %v383
        %v385 = vpop.f32.mrb[0].mxu0
        %v386 = vpop.f32.mrb[0].mxu0
        %387 = vdwg.mxu0
        %s388 = scalar_lea.vmem [#allocation5], 4
        %v389 = vld [vmem:[%s388] sm:$0x3]
        %v391 = vsel %vm286, %v389, 0
        %v394 = vsel %vm290, %v281, 0
        %v397 = vsel %vm290, %v282, 0
        %399 = vmatprep.subr.bf16.mxu0 %v397
        %400 = vmatpush1.bf16.msra.mxu0 %v394
        %401 = vmatprep.subr.bf16.mxu0 0
        %402 = vmatpush1.bf16.msra.mxu0 0
        %403 = vmatprep.subr.bf16.mxu0 0
        %404 = vmatpush1.bf16.msra.mxu0 0
        %405 = vmatprep.subr.bf16.mxu0 0
        %406 = vmatpush1.bf16.msra.mxu0 0
        %407 = vmatprep.subr.bf16.mxu0 0
        %408 = vmatpush1.bf16.msra.mxu0 0
        %409 = vmatprep.subr.bf16.mxu0 0
        %410 = vmatpush1.bf16.msra.mxu0 0
        %411 = vmatprep.subr.bf16.mxu0 0
        %412 = vmatpush1.bf16.msra.mxu0 0
        %413 = vmatprep.subr.bf16.mxu0 0
        %414 = vmatpush1.bf16.msra.mxu0 0
        %415 = vmatprep.subr.bf16.mxu0 0
        %416 = vmatpush1.bf16.msra.mxu0 0
        %417 = vmatprep.subr.bf16.mxu0 0
        %418 = vmatpush1.bf16.msra.mxu0 0
        %419 = vmatprep.subr.bf16.mxu0 0
        %420 = vmatpush1.bf16.msra.mxu0 0
        %421 = vmatprep.subr.bf16.mxu0 0
        %422 = vmatpush1.bf16.msra.mxu0 0
        %423 = vmatprep.subr.bf16.mxu0 0
        %424 = vmatpush1.bf16.msra.mxu0 0
        %425 = vmatprep.subr.bf16.mxu0 0
        %426 = vmatpush1.bf16.msra.mxu0 0
        %427 = vmatprep.subr.bf16.mxu0 0
        %428 = vmatpush1.bf16.msra.mxu0 0
        %429 = vmatprep.subr.bf16.mxu0 0
        %430 = vmatpush1.bf16.msra.mxu0 0
        %431 = vmatprep.mubr.bf16.mxu0 0
        %432 = vmatmul.mubr.bf16.gmra.mrb[0].mxu0 %v391
        %v433 = vpop.f32.mrb[0].mxu0
        %v434 = vadd.f32 0.0, %v433
        %v435 = vpop.f32.mrb[0].mxu0
        %v436 = vadd.f32 0.0, %v435
        %v437 = vpop.f32.mrb[0].mxu0
        %v438 = vpop.f32.mrb[0].mxu0
        %439 = vdwg.mxu0
        %v440 = vadd.f32 %v382, %v434
        %v441 = vadd.f32 %v384, %v436
        %444 = vrot.lane.b32.xlu0 %v440, 16
        %v445 = vpop.permute.xlu0 %444
        %446 = vrot.lane.b32.xlu0 %v441, 16
        %v447 = vpop.permute.xlu0 %446
        %vm448 = vcmask 130048
        %v449 = vsel %vm448, %v445, %v447
        %v452 = vsel %vm448, 0.0, %v445
        %s453 = scalar_lea.vmem [#allocation5], 6
        %v454 = vld [vmem:[%s453] sm:$0x3]
        %s455 = scalar_lea.vmem [#allocation5], 8
        %v456 = vld [vmem:[%s455] sm:$0x3]
        %v458 = vsel %vm286, %v456, 0
        %460 = vmatprep.subr.bf16.mxu0 %v295
        %461 = vmatpush1.bf16.msra.mxu0 %v292
        %462 = vmatprep.subr.bf16.mxu0 0
        %463 = vmatpush1.bf16.msra.mxu0 0
        %464 = vmatprep.subr.bf16.mxu0 0
        %465 = vmatpush1.bf16.msra.mxu0 0
        %466 = vmatprep.subr.bf16.mxu0 0
        %467 = vmatpush1.bf16.msra.mxu0 0
        %468 = vmatprep.subr.bf16.mxu0 0
        %469 = vmatpush1.bf16.msra.mxu0 0
        %470 = vmatprep.subr.bf16.mxu0 0
        %471 = vmatpush1.bf16.msra.mxu0 0
        %472 = vmatprep.subr.bf16.mxu0 0
        %473 = vmatpush1.bf16.msra.mxu0 0
        %474 = vmatprep.subr.bf16.mxu0 0
        %475 = vmatpush1.bf16.msra.mxu0 0
        %476 = vmatprep.subr.bf16.mxu0 0
        %477 = vmatpush1.bf16.msra.mxu0 0
        %478 = vmatprep.subr.bf16.mxu0 0
        %479 = vmatpush1.bf16.msra.mxu0 0
        %480 = vmatprep.subr.bf16.mxu0 0
        %481 = vmatpush1.bf16.msra.mxu0 0
        %482 = vmatprep.subr.bf16.mxu0 0
        %483 = vmatpush1.bf16.msra.mxu0 0
        %484 = vmatprep.subr.bf16.mxu0 0
        %485 = vmatpush1.bf16.msra.mxu0 0
        %486 = vmatprep.subr.bf16.mxu0 0
        %487 = vmatpush1.bf16.msra.mxu0 0
        %488 = vmatprep.subr.bf16.mxu0 0
        %489 = vmatpush1.bf16.msra.mxu0 0
        %490 = vmatprep.subr.bf16.mxu0 0
        %491 = vmatpush1.bf16.msra.mxu0 0
        %492 = vmatprep.mubr.bf16.mxu0 0
        %493 = vmatmul.mubr.bf16.gmra.mrb[0].mxu0 %v458
        %v494 = vpop.f32.mrb[0].mxu0
        %v495 = vadd.f32 0.0, %v494
        %v496 = vpop.f32.mrb[0].mxu0
        %v497 = vadd.f32 0.0, %v496
        %v498 = vpop.f32.mrb[0].mxu0
        %v499 = vpop.f32.mrb[0].mxu0
        %500 = vdwg.mxu0
        %v502 = vsel %vm286, %v454, 0
        %504 = vmatprep.subr.bf16.mxu0 %v345
        %505 = vmatpush1.bf16.msra.mxu0 %v342
        %506 = vmatprep.subr.bf16.mxu0 0
        %507 = vmatpush1.bf16.msra.mxu0 0
        %508 = vmatprep.subr.bf16.mxu0 0
        %509 = vmatpush1.bf16.msra.mxu0 0
        %510 = vmatprep.subr.bf16.mxu0 0
        %511 = vmatpush1.bf16.msra.mxu0 0
        %512 = vmatprep.subr.bf16.mxu0 0
        %513 = vmatpush1.bf16.msra.mxu0 0
        %514 = vmatprep.subr.bf16.mxu0 0
        %515 = vmatpush1.bf16.msra.mxu0 0
        %516 = vmatprep.subr.bf16.mxu0 0
        %517 = vmatpush1.bf16.msra.mxu0 0
        %518 = vmatprep.subr.bf16.mxu0 0
        %519 = vmatpush1.bf16.msra.mxu0 0
        %520 = vmatprep.subr.bf16.mxu0 0
        %521 = vmatpush1.bf16.msra.mxu0 0
        %522 = vmatprep.subr.bf16.mxu0 0
        %523 = vmatpush1.bf16.msra.mxu0 0
        %524 = vmatprep.subr.bf16.mxu0 0
        %525 = vmatpush1.bf16.msra.mxu0 0
        %526 = vmatprep.subr.bf16.mxu0 0
        %527 = vmatpush1.bf16.msra.mxu0 0
        %528 = vmatprep.subr.bf16.mxu0 0
        %529 = vmatpush1.bf16.msra.mxu0 0
        %530 = vmatprep.subr.bf16.mxu0 0
        %531 = vmatpush1.bf16.msra.mxu0 0
        %532 = vmatprep.subr.bf16.mxu0 0
        %533 = vmatpush1.bf16.msra.mxu0 0
        %534 = vmatprep.subr.bf16.mxu0 0
        %535 = vmatpush1.bf16.msra.mxu0 0
        %536 = vmatprep.mubr.bf16.mxu0 0
        %537 = vmatmul.mubr.bf16.gmra.mrb[0].mxu0 %v502
        %v538 = vpop.f32.mrb[0].mxu0
        %v539 = vadd.f32 %v495, %v538
        %v540 = vpop.f32.mrb[0].mxu0
        %v541 = vadd.f32 %v497, %v540
        %v542 = vpop.f32.mrb[0].mxu0
        %v543 = vpop.f32.mrb[0].mxu0
        %544 = vdwg.mxu0
        %s545 = scalar_lea.vmem [#allocation5], 10
        %v546 = vld [vmem:[%s545] sm:$0x3]
        %v548 = vsel %vm286, %v546, 0
        %550 = vmatprep.subr.bf16.mxu0 %v397
        %551 = vmatpush1.bf16.msra.mxu0 %v394
        %552 = vmatprep.subr.bf16.mxu0 0
        %553 = vmatpush1.bf16.msra.mxu0 0
        %554 = vmatprep.subr.bf16.mxu0 0
        %555 = vmatpush1.bf16.msra.mxu0 0
        %556 = vmatprep.subr.bf16.mxu0 0
        %557 = vmatpush1.bf16.msra.mxu0 0
        %558 = vmatprep.subr.bf16.mxu0 0
        %559 = vmatpush1.bf16.msra.mxu0 0
        %560 = vmatprep.subr.bf16.mxu0 0
        %561 = vmatpush1.bf16.msra.mxu0 0
        %562 = vmatprep.subr.bf16.mxu0 0
        %563 = vmatpush1.bf16.msra.mxu0 0
        %564 = vmatprep.subr.bf16.mxu0 0
        %565 = vmatpush1.bf16.msra.mxu0 0
        %566 = vmatprep.subr.bf16.mxu0 0
        %567 = vmatpush1.bf16.msra.mxu0 0
        %568 = vmatprep.subr.bf16.mxu0 0
        %569 = vmatpush1.bf16.msra.mxu0 0
        %570 = vmatprep.subr.bf16.mxu0 0
        %571 = vmatpush1.bf16.msra.mxu0 0
        %572 = vmatprep.subr.bf16.mxu0 0
        %573 = vmatpush1.bf16.msra.mxu0 0
        %574 = vmatprep.subr.bf16.mxu0 0
        %575 = vmatpush1.bf16.msra.mxu0 0
        %576 = vmatprep.subr.bf16.mxu0 0
        %577 = vmatpush1.bf16.msra.mxu0 0
        %578 = vmatprep.subr.bf16.mxu0 0
        %579 = vmatpush1.bf16.msra.mxu0 0
        %580 = vmatprep.subr.bf16.mxu0 0
        %581 = vmatpush1.bf16.msra.mxu0 0
        %582 = vmatprep.mubr.bf16.mxu0 0
        %583 = vmatmul.mubr.bf16.gmra.mrb[0].mxu0 %v548
        %v584 = vpop.f32.mrb[0].mxu0
        %v585 = vadd.f32 0.0, %v584
        %v586 = vpop.f32.mrb[0].mxu0
        %v587 = vadd.f32 0.0, %v586
        %v588 = vpop.f32.mrb[0].mxu0
        %v589 = vpop.f32.mrb[0].mxu0
        %590 = vdwg.mxu0
        %v591 = vadd.f32 %v539, %v585
        %v592 = vadd.f32 %v541, %v587
        %v593 = vadd.f32 %v452, %v591
        %v594 = vadd.f32 %v449, %v592
        %s595 = scalar_lea.vmem [#allocation5], 12
        %v596 = vld [vmem:[%s595] sm:$0x3]
        %s597 = scalar_lea.vmem [#allocation5], 14
        %v598 = vld [vmem:[%s597] sm:$0x3]
        %v600 = vsel %vm286, %v598, 0
        %602 = vmatprep.subr.bf16.mxu0 %v295
        %603 = vmatpush1.bf16.msra.mxu0 %v292
        %604 = vmatprep.subr.bf16.mxu0 0
        %605 = vmatpush1.bf16.msra.mxu0 0
        %606 = vmatprep.subr.bf16.mxu0 0
        %607 = vmatpush1.bf16.msra.mxu0 0
        %608 = vmatprep.subr.bf16.mxu0 0
        %609 = vmatpush1.bf16.msra.mxu0 0
        %610 = vmatprep.subr.bf16.mxu0 0
        %611 = vmatpush1.bf16.msra.mxu0 0
        %612 = vmatprep.subr.bf16.mxu0 0
        %613 = vmatpush1.bf16.msra.mxu0 0
        %614 = vmatprep.subr.bf16.mxu0 0
        %615 = vmatpush1.bf16.msra.mxu0 0
        %616 = vmatprep.subr.bf16.mxu0 0
        %617 = vmatpush1.bf16.msra.mxu0 0
        %618 = vmatprep.subr.bf16.mxu0 0
        %619 = vmatpush1.bf16.msra.mxu0 0
        %620 = vmatprep.subr.bf16.mxu0 0
        %621 = vmatpush1.bf16.msra.mxu0 0
        %622 = vmatprep.subr.bf16.mxu0 0
        %623 = vmatpush1.bf16.msra.mxu0 0
        %624 = vmatprep.subr.bf16.mxu0 0
        %625 = vmatpush1.bf16.msra.mxu0 0
        %626 = vmatprep.subr.bf16.mxu0 0
        %627 = vmatpush1.bf16.msra.mxu0 0
        %628 = vmatprep.subr.bf16.mxu0 0
        %629 = vmatpush1.bf16.msra.mxu0 0
        %630 = vmatprep.subr.bf16.mxu0 0
        %631 = vmatpush1.bf16.msra.mxu0 0
        %632 = vmatprep.subr.bf16.mxu0 0
        %633 = vmatpush1.bf16.msra.mxu0 0
        %634 = vmatprep.mubr.bf16.mxu0 0
        %635 = vmatmul.mubr.bf16.gmra.mrb[0].mxu0 %v600
        %v636 = vpop.f32.mrb[0].mxu0
        %v637 = vadd.f32 0.0, %v636
        %v638 = vpop.f32.mrb[0].mxu0
        %v639 = vadd.f32 0.0, %v638
        %v640 = vpop.f32.mrb[0].mxu0
        %v641 = vpop.f32.mrb[0].mxu0
        %642 = vdwg.mxu0
        %v644 = vsel %vm286, %v596, 0
        %646 = vmatprep.subr.bf16.mxu0 %v345
        %647 = vmatpush1.bf16.msra.mxu0 %v342
        %648 = vmatprep.subr.bf16.mxu0 0
        %649 = vmatpush1.bf16.msra.mxu0 0
        %650 = vmatprep.subr.bf16.mxu0 0
        %651 = vmatpush1.bf16.msra.mxu0 0
        %652 = vmatprep.subr.bf16.mxu0 0
        %653 = vmatpush1.bf16.msra.mxu0 0
        %654 = vmatprep.subr.bf16.mxu0 0
        %655 = vmatpush1.bf16.msra.mxu0 0
        %656 = vmatprep.subr.bf16.mxu0 0
        %657 = vmatpush1.bf16.msra.mxu0 0
        %658 = vmatprep.subr.bf16.mxu0 0
        %659 = vmatpush1.bf16.msra.mxu0 0
        %660 = vmatprep.subr.bf16.mxu0 0
        %661 = vmatpush1.bf16.msra.mxu0 0
        %662 = vmatprep.subr.bf16.mxu0 0
        %663 = vmatpush1.bf16.msra.mxu0 0
        %664 = vmatprep.subr.bf16.mxu0 0
        %665 = vmatpush1.bf16.msra.mxu0 0
        %666 = vmatprep.subr.bf16.mxu0 0
        %667 = vmatpush1.bf16.msra.mxu0 0
        %668 = vmatprep.subr.bf16.mxu0 0
        %669 = vmatpush1.bf16.msra.mxu0 0
        %670 = vmatprep.subr.bf16.mxu0 0
        %671 = vmatpush1.bf16.msra.mxu0 0
        %672 = vmatprep.subr.bf16.mxu0 0
        %673 = vmatpush1.bf16.msra.mxu0 0
        %674 = vmatprep.subr.bf16.mxu0 0
        %675 = vmatpush1.bf16.msra.mxu0 0
        %676 = vmatprep.subr.bf16.mxu0 0
        %677 = vmatpush1.bf16.msra.mxu0 0
        %678 = vmatprep.mubr.bf16.mxu0 0
        %679 = vmatmul.mubr.bf16.gmra.mrb[0].mxu0 %v644
        %v680 = vpop.f32.mrb[0].mxu0
        %v681 = vadd.f32 %v637, %v680
        %v682 = vpop.f32.mrb[0].mxu0
        %v683 = vadd.f32 %v639, %v682
        %v684 = vpop.f32.mrb[0].mxu0
        %v685 = vpop.f32.mrb[0].mxu0
        %686 = vdwg.mxu0
        %s687 = scalar_lea.vmem [#allocation5], 16
        %v688 = vld [vmem:[%s687] sm:$0x3]
        %v690 = vsel %vm286, %v688, 0
        %692 = vmatprep.subr.bf16.mxu0 %v397
        %693 = vmatpush1.bf16.msra.mxu0 %v394
        %694 = vmatprep.subr.bf16.mxu0 0
        %695 = vmatpush1.bf16.msra.mxu0 0
        %696 = vmatprep.subr.bf16.mxu0 0
        %697 = vmatpush1.bf16.msra.mxu0 0
        %698 = vmatprep.subr.bf16.mxu0 0
        %699 = vmatpush1.bf16.msra.mxu0 0
        %700 = vmatprep.subr.bf16.mxu0 0
        %701 = vmatpush1.bf16.msra.mxu0 0
        %702 = vmatprep.subr.bf16.mxu0 0
        %703 = vmatpush1.bf16.msra.mxu0 0
        %704 = vmatprep.subr.bf16.mxu0 0
        %705 = vmatpush1.bf16.msra.mxu0 0
        %706 = vmatprep.subr.bf16.mxu0 0
        %707 = vmatpush1.bf16.msra.mxu0 0
        %708 = vmatprep.subr.bf16.mxu0 0
        %709 = vmatpush1.bf16.msra.mxu0 0
        %710 = vmatprep.subr.bf16.mxu0 0
        %711 = vmatpush1.bf16.msra.mxu0 0
        %712 = vmatprep.subr.bf16.mxu0 0
        %713 = vmatpush1.bf16.msra.mxu0 0
        %714 = vmatprep.subr.bf16.mxu0 0
        %715 = vmatpush1.bf16.msra.mxu0 0
        %716 = vmatprep.subr.bf16.mxu0 0
        %717 = vmatpush1.bf16.msra.mxu0 0
        %718 = vmatprep.subr.bf16.mxu0 0
        %719 = vmatpush1.bf16.msra.mxu0 0
        %720 = vmatprep.subr.bf16.mxu0 0
        %721 = vmatpush1.bf16.msra.mxu0 0
        %722 = vmatprep.subr.bf16.mxu0 0
        %723 = vmatpush1.bf16.msra.mxu0 0
        %724 = vmatprep.mubr.bf16.mxu0 0
        %725 = vmatmul.mubr.bf16.gmra.mrb[0].mxu0 %v690
        %v726 = vpop.f32.mrb[0].mxu0
        %v727 = vadd.f32 0.0, %v726
        %v728 = vpop.f32.mrb[0].mxu0
        %v729 = vadd.f32 0.0, %v728
        %v730 = vpop.f32.mrb[0].mxu0
        %v731 = vpop.f32.mrb[0].mxu0
        %732 = vdwg.mxu0
        %v733 = vadd.f32 %v681, %v727
        %v734 = vadd.f32 %v683, %v729
        %737 = vrot.lane.b32.xlu0 %v733, 112
        %v738 = vpop.permute.xlu0 %737
        %739 = vrot.lane.b32.xlu0 %v734, 112
        %v740 = vpop.permute.xlu0 %739
        %vm741 = vcmask 916480
        %v742 = vsel %vm741, %v738, %v740
        %v745 = vsel %vm741, %v740, 0.0
        %v746 = vadd.f32 %v593, %v742
        %v747 = vadd.f32 %v594, %v745
        %v748 = vld [vmem:[%s2] sm:$0xf]
        %750 = vset.pattern.permute.xlu0 0
        %751 = vperm.xlu0 %750, %v748
        %v752 = vpop.permute.xlu0 %751
        %v754 = vadd.f32 %v746, %v752
        %v755 = vadd.f32 %v747, %v752
        %v756 = vmax.f32 %v754, 0.0
        %v757 = vmax.f32 %v755, 0.0
        %v760 = vcombine.low %v756, %v757
        %762 = vst [vmem:[%s201] sm:$0xff] %v760
        %s763 = sand.u32 %s97, 1
        %s764 = scalar_lea.sflag [#allocation4], %s763
        %s765 = sand.u32 %s97, 1
        %s766 = smul.addr %s765, 8
        %s767 = scalar_lea.vmem [#allocation7], %s766
        // Predicated region
        $region41: #{tpu_custom_call.1} parent=31 // pred_check
          %p768 = pneg %p107
        $region42: #{tpu_custom_call.1} parent=31 // pred_check_branch
          %770 = sbr.rel (%p768) target = $region44
        $region43: #{tpu_custom_call.1} parent=31 // pred_region
          %s772 = ssub.s32 128, 128
          %773 = vsyncadd %s764, %s772
          %s774 = smul.addr %s21, 2
          %s775 = smul.addr %s774, 64
          %s776 = scalar_lea.hbm %s3, %s775
          %s778 = sshll.u32 %s767, 4
          %s779 = int_to_ptr.vmem [resolvable:$true] %s778
          %781 = dma.vmem_to_hbm [thread:$0]  %s779, 128, %s776, %s764
        $region44: #{tpu_custom_call.1} parent=31 // pred_fallthru
          _
      $region32: #{tpu_custom_call.1} parent=5 // pred_fallthru
        _
      %p782 = scmp.le.s32.totalorder 2, %s16
      // Predicated region
      $region45: #{tpu_custom_call.1} parent=5 // pred_check
        %p783 = pneg %p782
      $region46: #{tpu_custom_call.1} parent=5 // pred_check_branch
        %785 = sbr.rel (%p783) target = $region48
      $region47: #{tpu_custom_call.1} parent=5 // pred_region
        %s786 = ssub.s32 %s16, 2
        // Predicated region
        $region49: #{tpu_custom_call.1} parent=47 // pred_check
          %p787 = pneg %p113
        $region50: #{tpu_custom_call.1} parent=47 // pred_check_branch
          %789 = sbr.rel (%p787) target = $region52
        $region51: #{tpu_custom_call.1} parent=47 // pred_region
          %s790 = sand.u32 %s98, 1
          %s791 = scalar_lea.sflag [#allocation4], %s790
          %s792 = sand.u32 %s98, 1
          %s793 = smul.addr %s792, 8
          %s794 = scalar_lea.vmem [#allocation7], %s793
          %795 = dma.done %s791, 128
        $region52: #{tpu_custom_call.1} parent=47 // pred_fallthru
          _
      $region48: #{tpu_custom_call.1} parent=5 // pred_fallthru
        _
    $region6: #{tpu_custom_call.1} parent=1 // loop_footer
      %s20 = sadd.s32 1, %s16
    $region7: #{tpu_custom_call.1} parent=1 // loop_footer_branch
      %15 = sbr.rel target = $region3
    $region8: #{tpu_custom_call.1} parent=1 // loop_exit
      _
    %796 = vsyncpa [#allocation3], 1
    %s797 = scalar_lea.sflag [#allocation3], 1
    %798 = vsyncpa %s797, 1
    %799 = vsyncpa [#allocation6], 1
    %800 = vsyncpa [#allocation4], 1
    %s801 = scalar_lea.sflag [#allocation4], 1
    %802 = vsyncpa %s801, 1

</llo_original>
